<compile_context>
chip_gen: v5e
topology: v5e:2x2
jax: 0.10.0
libtpu: 0.0.40
codegen_flags: <defaults>
</compile_context>

<pallas_src>
import functools
import math

import jax
import jax.numpy as jnp
from jax import lax
from jax.experimental import pallas as pl
from jax.experimental.pallas import tpu as pltpu

LANES = 128
SUBLANES = 8
SUBTILE = SUBLANES * LANES          # 1024-element (8,128) f32 sub-tile
MAX_BLOCK_ROWS = 4096               # (4096,128) f32 = 2 MiB per stream per block
CHUNK_ROWS = 256                    # inner-loop chunk: (256,128) f32 = 128 KiB


def _fold_to_sublane(v):
    """(k*8, 128) -> (8, 128) via a VPU add-tree (tile-aligned slices, no XLU)."""
    nsub = v.shape[0] // SUBLANES
    slabs = [v[r * SUBLANES:(r + 1) * SUBLANES] for r in range(nsub)]
    while len(slabs) > 1:
        nxt = [a + b for a, b in zip(slabs[::2], slabs[1::2])]
        if len(slabs) % 2:
            nxt.append(slabs[-1])
        slabs = nxt
    return slabs[0]


def _combo_kernel(pred_ref, label_ref, out_ref, *, if_sigmoid, alpha, eps,
                  rows_valid, inner_steps, block_rows, chunk_rows):
    s = pl.program_id(0)            # megacore split axis ("parallel")
    j = pl.program_id(1)            # streaming axis ("arbitrary")

    # Output block (3, 8, 128) stays VMEM-resident across the inner axis:
    # zero once per split, accumulate every step.
    @pl.when(j == 0)
    def _():
        out_ref[...] = jnp.zeros_like(out_ref)

    # Unclamped block index: spare programs of the split (the index_map clamps
    # them onto the last real block) fall on the masked path and contribute 0.
    block_idx = s * inner_steps + j
    block_row0 = block_idx * block_rows     # row units -> no i32 overflow issues

    neg_log_eps = -math.log(eps)
    c1 = float(alpha)
    c2 = float(alpha) * (1.0 - float(alpha))

    def elementwise(x, l):
        """Per-chunk math. Returns (p*l, p+l, ce) with ce already positive."""
        if not if_sigmoid:
            # Shared e = exp(-|x|):
            #   softplus(-x) = max(-x,0) + log(1+e) = -log(sigmoid(x))
            #   softplus( x) = max( x,0) + log(1+e) = -log(1 - sigmoid(x))
            #   sigmoid(x)   = exp(-softplus(-x))          (no divide needed)
            e = jnp.exp(-jnp.abs(x))
            lg = jnp.log(1.0 + e)
            relu_x = jnp.maximum(x, 0.0)
            sp_neg = (relu_x - x) + lg          # softplus(-x) >= 0
            sp_pos = relu_x + lg                # softplus(x)  >= 0
            p = jnp.exp(-sp_neg)                # exact sigmoid for the Dice term
            # clamp at -log(eps): reproduces the reference clip(p, eps, 1-eps)
            nlp_p = jnp.minimum(sp_neg, neg_log_eps)     # -log(clip(p))
            nlp_1mp = jnp.minimum(sp_pos, neg_log_eps)   # -log(clip(1-p))
        else:
            p = x
            pc = jnp.clip(x, eps, 1.0 - eps)
            nlp_p = -jnp.log(pc)
            nlp_1mp = -jnp.log(1.0 - pc)
        # out = c1*l*nlp_p + c2*(1-l)*nlp_1mp, factored to 5 VPU ops/element.
        t = c2 * nlp_1mp
        ce = l * (c1 * nlp_p - t) + t
        return p * l, p + l, ce

    def accumulate_chunk(r0, carry, crows, masked):
        acc_i, acc_s, acc_c = carry
        x = pred_ref[pl.ds(r0, crows), :].astype(jnp.float32)
        l = label_ref[pl.ds(r0, crows), :].astype(jnp.float32)
        inter, psum, ce = elementwise(x, l)
        if masked:
            # Row-granular validity (the aligned prefix is a whole number of
            # 128-lane rows). Selects kill NaN/Inf garbage from the block's
            # overhang beyond the array / spare clamped programs.
            rid = lax.broadcasted_iota(jnp.int32, (crows, LANES), 0)
            valid = (block_row0 + r0 + rid) < rows_valid
            zero = jnp.zeros_like(inter)
            inter = jnp.where(valid, inter, zero)
            psum = jnp.where(valid, psum, zero)
            ce = jnp.where(valid, ce, zero)
        return (acc_i + _fold_to_sublane(inter),
                acc_s + _fold_to_sublane(psum),
                acc_c + _fold_to_sublane(ce))

    n_full = block_rows // chunk_rows
    rem_rows = block_rows - n_full * chunk_rows   # static, multiple of 8

    def run(masked):
        carry = (out_ref[0], out_ref[1], out_ref[2])
        if n_full == 1:
            carry = accumulate_chunk(0, carry, chunk_rows, masked)
        elif n_full > 1:
            def body(c, carry):
                r0 = pl.multiple_of(c * chunk_rows, chunk_rows)
                return accumulate_chunk(r0, carry, chunk_rows, masked)
            carry = lax.fori_loop(0, n_full, body, carry, unroll=True)
        if rem_rows:
            carry = accumulate_chunk(n_full * chunk_rows, carry, rem_rows, masked)
        acc_i, acc_s, acc_c = carry
        out_ref[0] = acc_i
        out_ref[1] = acc_s
        out_ref[2] = acc_c

    block_is_full = block_row0 + block_rows <= rows_valid

    @pl.when(block_is_full)
    def _():
        run(masked=False)          # fast path: no iota / compare / selects

    @pl.when(jnp.logical_not(block_is_full))
    def _():
        run(masked=True)           # at most one partial block per split


def _tail_partials(x, l, if_sigmoid, alpha, eps):
    """Plain-jnp partial sums for the (<1024-element) unaligned tail."""
    x = x.astype(jnp.float32)
    l = l.astype(jnp.float32)
    p = x if if_sigmoid else jax.nn.sigmoid(x)
    pc = jnp.clip(p, eps, 1.0 - eps)
    ce = alpha * (l * (-jnp.log(pc))
                  + (1.0 - alpha) * (1.0 - l) * (-jnp.log(1.0 - pc)))
    return jnp.sum(p * l), jnp.sum(p) + jnp.sum(l), jnp.sum(ce)


def _default_num_splits():
    """2 on chips exposing two TensorCores to one program (v4/v5p/v7x), else 1."""
    try:
        kind = jax.devices()[0].device_kind.lower()
    except Exception:
        return 1
    return 2 if any(t in kind for t in ("v4", "v5p", "v7", "7x")) else 1


def combo_loss(prediction, label, *, used_sigmoid_actfun=False, smooth=1.0,
               ce_ratio=0.5, alpha=0.5, eps=1e-9,
               max_block_rows=MAX_BLOCK_ROWS, num_splits=None):
    """Pallas implementation of ComboLoss.forward. Returns a scalar float32."""
    pred_flat = prediction.reshape(-1)
    label_flat = label.reshape(-1)
    n = pred_flat.shape[0]

    n_main = (n // SUBTILE) * SUBTILE       # kernel handles the aligned prefix
    rows = n_main // LANES                  # multiple of 8

    inter = jnp.float32(0.0)
    psum = jnp.float32(0.0)
    ce_sum = jnp.float32(0.0)

    if rows > 0:
        if n_main == n:
            pred2d = pred_flat.reshape(rows, LANES)      # free bitcast reshape
            label2d = label_flat.reshape(rows, LANES)
        else:
            # TODO(synk): a truly zero-copy tail would need an in-kernel partial
            # DMA from a pl.ANY ref; for unaligned inputs this slices (copies)
            # the prefix once instead of padding both full streams.
            pred2d = pred_flat[:n_main].reshape(rows, LANES)
            label2d = label_flat[:n_main].reshape(rows, LANES)

        block_rows = min(int(max_block_rows), rows)
        if block_rows != rows:
            block_rows = max(SUBLANES, (block_rows // SUBLANES) * SUBLANES)
        chunk_rows = min(CHUNK_ROWS, block_rows)
        nb = -(-rows // block_rows)

        n_splits = _default_num_splits() if num_splits is None else int(num_splits)
        n_splits = max(1, min(n_splits, nb))
        inner = -(-nb // n_splits)

        def in_map(si, ji):
            # Clamp so spare programs of the split re-read the last real block;
            # their contribution is zeroed by the in-kernel masked path.
            return (jnp.minimum(si * inner + ji, nb - 1), 0)

        kernel = functools.partial(
            _combo_kernel,
            if_sigmoid=bool(used_sigmoid_actfun),
            alpha=float(alpha),
            eps=float(eps),
            rows_valid=rows,
            inner_steps=inner,
            block_rows=block_rows,
            chunk_rows=chunk_rows,
        )

        bytes_in = (pred2d.size * pred2d.dtype.itemsize
                    + label2d.size * label2d.dtype.itemsize)
        cost = pl.CostEstimate(
            flops=30 * n_main,
            transcendentals=(3 if not used_sigmoid_actfun else 2) * n_main,
            bytes_accessed=bytes_in + n_splits * 3 * SUBTILE * 4,
        )

        partials = pl.pallas_call(
            kernel,
            out_shape=jax.ShapeDtypeStruct((n_splits * 3, SUBLANES, LANES),
                                           jnp.float32),
            grid_spec=pltpu.PrefetchScalarGridSpec(
                num_scalar_prefetch=0,
                grid=(n_splits, inner),
                in_specs=[
                    pl.BlockSpec((block_rows, LANES), in_map),
                    pl.BlockSpec((block_rows, LANES), in_map),
                ],
                out_specs=pl.BlockSpec((3, SUBLANES, LANES),
                                       lambda si, ji: (si, 0, 0)),
            ),
            compiler_params=pltpu.CompilerParams(
                dimension_semantics=("parallel", "arbitrary"),
                vmem_limit_bytes=32 * 1024 * 1024,
            ),
            cost_estimate=cost,
        )(pred2d, label2d)

        # Tiny epilogue: one cross-lane reduce over (splits, 3, 8, 128).
        sums = jnp.sum(partials.reshape(n_splits, 3, SUBLANES, LANES),
                       axis=(0, 2, 3))
        inter, psum, ce_sum = sums[0], sums[1], sums[2]

    if n_main < n:
        ti, tp, tc = _tail_partials(pred_flat[n_main:], label_flat[n_main:],
                                    bool(used_sigmoid_actfun), float(alpha),
                                    float(eps))
        inter = inter + ti
        psum = psum + tp
        ce_sum = ce_sum + tc

    dice = (2.0 * inter + smooth) / (psum + smooth)
    weighted_ce = ce_sum / jnp.float32(n)
    return ce_ratio * weighted_ce - (1.0 - ce_ratio) * dice


def _combo_loss_ref(prediction, label, *, used_sigmoid_actfun=False,
                    smooth=1.0, ce_ratio=0.5, alpha=0.5, eps=1e-9):
    p = prediction.astype(jnp.float32)
    if not used_sigmoid_actfun:
        p = jax.nn.sigmoid(p)
    p = p.reshape(-1)
    l = label.reshape(-1).astype(jnp.float32)
    intersection = jnp.sum(p * l)
    dice = (2.0 * intersection + smooth) / (jnp.sum(p) + jnp.sum(l) + smooth)
    pc = jnp.clip(p, eps, 1.0 - eps)
    out = -(alpha * (l * jnp.log(pc)
                     + (1.0 - alpha) * (1.0 - l) * jnp.log(1.0 - pc)))
    weighted_ce = jnp.mean(out)
    return ce_ratio * weighted_ce - (1.0 - ce_ratio) * dice


if __name__ == "__main__":
    key = jax.random.PRNGKey(0)
    k1, k2, k3, k4 = jax.random.split(key, 4)
    ATOL = RTOL = 2e-5

    # 1) Aligned logits input: batch=2, channels=4, spatial=16x16.
    x = jax.random.normal(k1, (2, 4, 16, 16), dtype=jnp.float32)
    y = (jax.random.uniform(k2, (2, 4, 16, 16)) > 0.5).astype(jnp.float32)
    loss = jax.block_until_ready(combo_loss(x, y, used_sigmoid_actfun=False))
    ref = _combo_loss_ref(x, y, used_sigmoid_actfun=False)
    assert jnp.allclose(loss, ref, atol=ATOL, rtol=RTOL), (loss, ref)

    # 2) Probability-input branch.
    p = jax.nn.sigmoid(x)
    loss2 = jax.block_until_ready(combo_loss(p, y, used_sigmoid_actfun=True))
    ref2 = _combo_loss_ref(p, y, used_sigmoid_actfun=True)
    assert jnp.allclose(loss2, ref2, atol=ATOL, rtol=RTOL), (loss2, ref2)

    # 3) Non-subtile-aligned input -> kernel prefix + plain-jnp tail.
    x3 = jax.random.normal(k3, (2, 3, 17, 13), dtype=jnp.float32)
    y3 = (jax.random.uniform(k4, (2, 3, 17, 13)) > 0.5).astype(jnp.float32)
    loss3 = jax.block_until_ready(combo_loss(x3, y3, used_sigmoid_actfun=False))
    ref3 = _combo_loss_ref(x3, y3, used_sigmoid_actfun=False)
    assert jnp.allclose(loss3, ref3, atol=ATOL, rtol=RTOL), (loss3, ref3)

    # 4) Multi-block grid + forced 2-way split + masked edge block (tiny block
    #    size to exercise the big-input code paths at small scale).
    x4 = jax.random.normal(k3, (3, 4, 16, 16), dtype=jnp.float32)   # 3072 elems
    y4 = (jax.random.uniform(k4, (3, 4, 16, 16)) > 0.5).astype(jnp.float32)
    loss4 = jax.block_until_ready(
        combo_loss(x4, y4, used_sigmoid_actfun=False,
                   max_block_rows=16, num_splits=2))
    ref4 = _combo_loss_ref(x4, y4, used_sigmoid_actfun=False)
    assert jnp.allclose(loss4, ref4, atol=ATOL, rtol=RTOL), (loss4, ref4)

    # 5) Larger (still small) input exercising the unrolled multi-chunk inner
    #    loop plus a remainder chunk: 66560 elems -> 520 rows -> 2x256 + 8.
    x5 = jax.random.normal(k1, (5, 13, 32, 32), dtype=jnp.float32)
    y5 = (jax.random.uniform(k2, (5, 13, 32, 32)) > 0.5).astype(jnp.float32)
    loss5 = jax.block_until_ready(combo_loss(x5, y5, used_sigmoid_actfun=False))
    ref5 = _combo_loss_ref(x5, y5, used_sigmoid_actfun=False)
    assert jnp.allclose(loss5, ref5, atol=ATOL, rtol=RTOL), (loss5, ref5)

    print("KERNEL_OK")
</pallas_src>

<mosaic_0001>
module attributes {stable_mosaic.version = 11 : i64} {
  func.func @_combo_kernel(%arg0: i32, %arg1: i32, %arg2: memref<16x128xf32, #tpu.memory_space<vmem>>, %arg3: memref<16x128xf32, #tpu.memory_space<vmem>>, %arg4: memref<3x8x128xf32, #tpu.memory_space<vmem>>) attributes {dimension_semantics = [#tpu.dimension_semantics<parallel>, #tpu.dimension_semantics<arbitrary>], iteration_bounds = array<i64: 1, 1>, scalar_prefetch = 0 : i64, scratch_operands = 0 : i64, tpu.core_type = #tpu.core_type<tc>, window_params = [{transform_indices = @transform_0, window_bounds = array<i64: 16, 128>}, {transform_indices = @transform_1, window_bounds = array<i64: 16, 128>}, {transform_indices = @transform_2, window_bounds = array<i64: 3, 8, 128>}]} {
    %c0_i32 = arith.constant 0 : i32
    %0 = arith.cmpi eq, %arg1, %c0_i32 : i32
    %1 = arith.extui %0 : i1 to i32
    %c0_i32_0 = arith.constant 0 : i32
    %2 = arith.cmpi ne, %1, %c0_i32_0 : i32
    scf.if %2 {
      %cst = arith.constant 0.000000e+00 : f32
      %13 = vector.broadcast %cst : f32 to vector<3x8x128xf32>
      %c0 = arith.constant 0 : index
      %c0_5 = arith.constant 0 : index
      %c0_6 = arith.constant 0 : index
      %14 = vector.load %arg4[%c0, %c0_5, %c0_6] : memref<3x8x128xf32, #tpu.memory_space<vmem>>, vector<3x8x128xf32>
      tpu.vector_store %arg4[%c0, %c0_5, %c0_6], %13 {strides = array<i32>} : memref<3x8x128xf32, #tpu.memory_space<vmem>>, vector<3x8x128xf32>,
    } else {
    }
    %c1_i32 = arith.constant 1 : i32
    %3 = arith.muli %arg0, %c1_i32 : i32
    %4 = arith.addi %3, %arg1 : i32
    %c16_i32 = arith.constant 16 : i32
    %5 = arith.muli %4, %c16_i32 : i32
    %c16_i32_1 = arith.constant 16 : i32
    %6 = arith.addi %5, %c16_i32_1 : i32
    %c16_i32_2 = arith.constant 16 : i32
    %7 = arith.cmpi sle, %6, %c16_i32_2 : i32
    %8 = arith.extui %7 : i1 to i32
    %c0_i32_3 = arith.constant 0 : i32
    %9 = arith.cmpi ne, %8, %c0_i32_3 : i32
    scf.if %9 {
      %c0 = arith.constant 0 : index
      %c0_5 = arith.constant 0 : index
      %c0_6 = arith.constant 0 : index
      %13 = vector.load %arg4[%c0, %c0_5, %c0_6] : memref<3x8x128xf32, #tpu.memory_space<vmem>>, vector<1x8x128xf32>
      %14 = vector.shape_cast %13 : vector<1x8x128xf32> to vector<8x128xf32>
      %c1 = arith.constant 1 : index
      %c0_7 = arith.constant 0 : index
      %c0_8 = arith.constant 0 : index
      %15 = vector.load %arg4[%c1, %c0_7, %c0_8] : memref<3x8x128xf32, #tpu.memory_space<vmem>>, vector<1x8x128xf32>
      %16 = vector.shape_cast %15 : vector<1x8x128xf32> to vector<8x128xf32>
      %c2 = arith.constant 2 : index
      %c0_9 = arith.constant 0 : index
      %c0_10 = arith.constant 0 : index
      %17 = vector.load %arg4[%c2, %c0_9, %c0_10] : memref<3x8x128xf32, #tpu.memory_space<vmem>>, vector<1x8x128xf32>
      %18 = vector.shape_cast %17 : vector<1x8x128xf32> to vector<8x128xf32>
      %c0_11 = arith.constant 0 : index
      %c0_12 = arith.constant 0 : index
      %19 = vector.load %arg2[%c0_11, %c0_12] : memref<16x128xf32, #tpu.memory_space<vmem>>, vector<16x128xf32>
      %c0_13 = arith.constant 0 : index
      %c0_14 = arith.constant 0 : index
      %20 = vector.load %arg3[%c0_13, %c0_14] : memref<16x128xf32, #tpu.memory_space<vmem>>, vector<16x128xf32>
      %21 = math.absf %19 : vector<16x128xf32>
      %cst = arith.constant 0.000000e+00 : f32
      %22 = vector.broadcast %cst : f32 to vector<16x128xf32>
      %23 = arith.subf %22, %21 : vector<16x128xf32>
      %24 = math.exp %23 : vector<16x128xf32>
      %cst_15 = arith.constant 1.000000e+00 : f32
      %25 = vector.broadcast %cst_15 : f32 to vector<16x128xf32>
      %26 = arith.addf %25, %24 : vector<16x128xf32>
      %27 = math.log %26 : vector<16x128xf32>
      %cst_16 = arith.constant 0.000000e+00 : f32
      %28 = vector.broadcast %cst_16 : f32 to vector<16x128xf32>
      %29 = arith.maximumf %19, %28 : vector<16x128xf32>
      %30 = arith.subf %29, %19 : vector<16x128xf32>
      %31 = arith.addf %30, %27 : vector<16x128xf32>
      %32 = arith.addf %29, %27 : vector<16x128xf32>
      %cst_17 = arith.constant 0.000000e+00 : f32
      %33 = vector.broadcast %cst_17 : f32 to vector<16x128xf32>
      %34 = arith.subf %33, %31 : vector<16x128xf32>
      %35 = math.exp %34 : vector<16x128xf32>
      %cst_18 = arith.constant 20.7232666 : f32
      %36 = vector.broadcast %cst_18 : f32 to vector<16x128xf32>
      %37 = arith.minimumf %31, %36 : vector<16x128xf32>
      %cst_19 = arith.constant 20.7232666 : f32
      %38 = vector.broadcast %cst_19 : f32 to vector<16x128xf32>
      %39 = arith.minimumf %32, %38 : vector<16x128xf32>
      %cst_20 = arith.constant 2.500000e-01 : f32
      %40 = vector.broadcast %cst_20 : f32 to vector<16x128xf32>
      %41 = arith.mulf %40, %39 : vector<16x128xf32>
      %cst_21 = arith.constant 5.000000e-01 : f32
      %42 = vector.broadcast %cst_21 : f32 to vector<16x128xf32>
      %43 = arith.mulf %42, %37 : vector<16x128xf32>
      %44 = arith.subf %43, %41 : vector<16x128xf32>
      %45 = arith.mulf %20, %44 : vector<16x128xf32>
      %46 = arith.addf %45, %41 : vector<16x128xf32>
      %47 = arith.mulf %35, %20 : vector<16x128xf32>
      %48 = arith.addf %35, %20 : vector<16x128xf32>
      %49 = vector.extract_strided_slice %47 {offsets = [0, 0], sizes = [8, 128], strides = [1, 1]} : vector<16x128xf32> to vector<8x128xf32>
      %50 = vector.extract_strided_slice %47 {offsets = [8, 0], sizes = [8, 128], strides = [1, 1]} : vector<16x128xf32> to vector<8x128xf32>
      %51 = arith.addf %49, %50 : vector<8x128xf32>
      %52 = arith.addf %14, %51 : vector<8x128xf32>
      %53 = vector.extract_strided_slice %48 {offsets = [0, 0], sizes = [8, 128], strides = [1, 1]} : vector<16x128xf32> to vector<8x128xf32>
      %54 = vector.extract_strided_slice %48 {offsets = [8, 0], sizes = [8, 128], strides = [1, 1]} : vector<16x128xf32> to vector<8x128xf32>
      %55 = arith.addf %53, %54 : vector<8x128xf32>
      %56 = arith.addf %16, %55 : vector<8x128xf32>
      %57 = vector.extract_strided_slice %46 {offsets = [0, 0], sizes = [8, 128], strides = [1, 1]} : vector<16x128xf32> to vector<8x128xf32>
      %58 = vector.extract_strided_slice %46 {offsets = [8, 0], sizes = [8, 128], strides = [1, 1]} : vector<16x128xf32> to vector<8x128xf32>
      %59 = arith.addf %57, %58 : vector<8x128xf32>
      %60 = arith.addf %18, %59 : vector<8x128xf32>
      %c0_22 = arith.constant 0 : index
      %c0_23 = arith.constant 0 : index
      %c0_24 = arith.constant 0 : index
      %61 = vector.load %arg4[%c0_22, %c0_23, %c0_24] : memref<3x8x128xf32, #tpu.memory_space<vmem>>, vector<1x8x128xf32>
      %62 = vector.shape_cast %61 : vector<1x8x128xf32> to vector<8x128xf32>
      %63 = vector.shape_cast %52 : vector<8x128xf32> to vector<1x8x128xf32>
      tpu.vector_store %arg4[%c0_22, %c0_23, %c0_24], %63 {strides = array<i32>} : memref<3x8x128xf32, #tpu.memory_space<vmem>>, vector<1x8x128xf32>,
      %c1_25 = arith.constant 1 : index
      %c0_26 = arith.constant 0 : index
      %c0_27 = arith.constant 0 : index
      %64 = vector.load %arg4[%c1_25, %c0_26, %c0_27] : memref<3x8x128xf32, #tpu.memory_space<vmem>>, vector<1x8x128xf32>
      %65 = vector.shape_cast %64 : vector<1x8x128xf32> to vector<8x128xf32>
      %66 = vector.shape_cast %56 : vector<8x128xf32> to vector<1x8x128xf32>
      tpu.vector_store %arg4[%c1_25, %c0_26, %c0_27], %66 {strides = array<i32>} : memref<3x8x128xf32, #tpu.memory_space<vmem>>, vector<1x8x128xf32>,
      %c2_28 = arith.constant 2 : index
      %c0_29 = arith.constant 0 : index
      %c0_30 = arith.constant 0 : index
      %67 = vector.load %arg4[%c2_28, %c0_29, %c0_30] : memref<3x8x128xf32, #tpu.memory_space<vmem>>, vector<1x8x128xf32>
      %68 = vector.shape_cast %67 : vector<1x8x128xf32> to vector<8x128xf32>
      %69 = vector.shape_cast %60 : vector<8x128xf32> to vector<1x8x128xf32>
      tpu.vector_store %arg4[%c2_28, %c0_29, %c0_30], %69 {strides = array<i32>} : memref<3x8x128xf32, #tpu.memory_space<vmem>>, vector<1x8x128xf32>,
    } else {
    }
    %true = arith.constant true
    %10 = arith.xori %7, %true : i1
    %11 = arith.extui %10 : i1 to i32
    %c0_i32_4 = arith.constant 0 : i32
    %12 = arith.cmpi ne, %11, %c0_i32_4 : i32
    scf.if %12 {
      %c0 = arith.constant 0 : index
      %c0_5 = arith.constant 0 : index
      %c0_6 = arith.constant 0 : index
      %13 = vector.load %arg4[%c0, %c0_5, %c0_6] : memref<3x8x128xf32, #tpu.memory_space<vmem>>, vector<1x8x128xf32>
      %14 = vector.shape_cast %13 : vector<1x8x128xf32> to vector<8x128xf32>
      %c1 = arith.constant 1 : index
      %c0_7 = arith.constant 0 : index
      %c0_8 = arith.constant 0 : index
      %15 = vector.load %arg4[%c1, %c0_7, %c0_8] : memref<3x8x128xf32, #tpu.memory_space<vmem>>, vector<1x8x128xf32>
      %16 = vector.shape_cast %15 : vector<1x8x128xf32> to vector<8x128xf32>
      %c2 = arith.constant 2 : index
      %c0_9 = arith.constant 0 : index
      %c0_10 = arith.constant 0 : index
      %17 = vector.load %arg4[%c2, %c0_9, %c0_10] : memref<3x8x128xf32, #tpu.memory_space<vmem>>, vector<1x8x128xf32>
      %18 = vector.shape_cast %17 : vector<1x8x128xf32> to vector<8x128xf32>
      %c0_11 = arith.constant 0 : index
      %c0_12 = arith.constant 0 : index
      %19 = vector.load %arg2[%c0_11, %c0_12] : memref<16x128xf32, #tpu.memory_space<vmem>>, vector<16x128xf32>
      %c0_13 = arith.constant 0 : index
      %c0_14 = arith.constant 0 : index
      %20 = vector.load %arg3[%c0_13, %c0_14] : memref<16x128xf32, #tpu.memory_space<vmem>>, vector<16x128xf32>
      %21 = math.absf %19 : vector<16x128xf32>
      %cst = arith.constant 0.000000e+00 : f32
      %22 = vector.broadcast %cst : f32 to vector<16x128xf32>
      %23 = arith.subf %22, %21 : vector<16x128xf32>
      %24 = math.exp %23 : vector<16x128xf32>
      %cst_15 = arith.constant 1.000000e+00 : f32
      %25 = vector.broadcast %cst_15 : f32 to vector<16x128xf32>
      %26 = arith.addf %25, %24 : vector<16x128xf32>
      %27 = math.log %26 : vector<16x128xf32>
      %cst_16 = arith.constant 0.000000e+00 : f32
      %28 = vector.broadcast %cst_16 : f32 to vector<16x128xf32>
      %29 = arith.maximumf %19, %28 : vector<16x128xf32>
      %30 = arith.subf %29, %19 : vector<16x128xf32>
      %31 = arith.addf %30, %27 : vector<16x128xf32>
      %32 = arith.addf %29, %27 : vector<16x128xf32>
      %cst_17 = arith.constant 0.000000e+00 : f32
      %33 = vector.broadcast %cst_17 : f32 to vector<16x128xf32>
      %34 = arith.subf %33, %31 : vector<16x128xf32>
      %35 = math.exp %34 : vector<16x128xf32>
      %cst_18 = arith.constant 20.7232666 : f32
      %36 = vector.broadcast %cst_18 : f32 to vector<16x128xf32>
      %37 = arith.minimumf %31, %36 : vector<16x128xf32>
      %cst_19 = arith.constant 20.7232666 : f32
      %38 = vector.broadcast %cst_19 : f32 to vector<16x128xf32>
      %39 = arith.minimumf %32, %38 : vector<16x128xf32>
      %cst_20 = arith.constant 2.500000e-01 : f32
      %40 = vector.broadcast %cst_20 : f32 to vector<16x128xf32>
      %41 = arith.mulf %40, %39 : vector<16x128xf32>
      %cst_21 = arith.constant 5.000000e-01 : f32
      %42 = vector.broadcast %cst_21 : f32 to vector<16x128xf32>
      %43 = arith.mulf %42, %37 : vector<16x128xf32>
      %44 = arith.subf %43, %41 : vector<16x128xf32>
      %45 = arith.mulf %20, %44 : vector<16x128xf32>
      %46 = arith.addf %45, %41 : vector<16x128xf32>
      %47 = arith.mulf %35, %20 : vector<16x128xf32>
      %48 = arith.addf %35, %20 : vector<16x128xf32>
      %49 = tpu.iota {dimensions = array<i32: 0>} : vector<16x128xi32>
      %c0_i32_22 = arith.constant 0 : i32
      %50 = arith.addi %5, %c0_i32_22 : i32
      %51 = vector.broadcast %50 : i32 to vector<16x128xi32>
      %52 = arith.addi %51, %49 : vector<16x128xi32>
      %c16_i32_23 = arith.constant 16 : i32
      %53 = vector.broadcast %c16_i32_23 : i32 to vector<16x128xi32>
      %54 = arith.cmpi slt, %52, %53 : vector<16x128xi32>
      %cst_24 = arith.constant 0.000000e+00 : f32
      %55 = vector.broadcast %cst_24 : f32 to vector<16x128xf32>
      %56 = arith.select %54, %47, %55 : vector<16x128xi1>, vector<16x128xf32>
      %57 = arith.select %54, %48, %55 : vector<16x128xi1>, vector<16x128xf32>
      %58 = arith.select %54, %46, %55 : vector<16x128xi1>, vector<16x128xf32>
      %59 = vector.extract_strided_slice %56 {offsets = [0, 0], sizes = [8, 128], strides = [1, 1]} : vector<16x128xf32> to vector<8x128xf32>
      %60 = vector.extract_strided_slice %56 {offsets = [8, 0], sizes = [8, 128], strides = [1, 1]} : vector<16x128xf32> to vector<8x128xf32>
      %61 = arith.addf %59, %60 : vector<8x128xf32>
      %62 = arith.addf %14, %61 : vector<8x128xf32>
      %63 = vector.extract_strided_slice %57 {offsets = [0, 0], sizes = [8, 128], strides = [1, 1]} : vector<16x128xf32> to vector<8x128xf32>
      %64 = vector.extract_strided_slice %57 {offsets = [8, 0], sizes = [8, 128], strides = [1, 1]} : vector<16x128xf32> to vector<8x128xf32>
      %65 = arith.addf %63, %64 : vector<8x128xf32>
      %66 = arith.addf %16, %65 : vector<8x128xf32>
      %67 = vector.extract_strided_slice %58 {offsets = [0, 0], sizes = [8, 128], strides = [1, 1]} : vector<16x128xf32> to vector<8x128xf32>
      %68 = vector.extract_strided_slice %58 {offsets = [8, 0], sizes = [8, 128], strides = [1, 1]} : vector<16x128xf32> to vector<8x128xf32>
      %69 = arith.addf %67, %68 : vector<8x128xf32>
      %70 = arith.addf %18, %69 : vector<8x128xf32>
      %c0_25 = arith.constant 0 : index
      %c0_26 = arith.constant 0 : index
      %c0_27 = arith.constant 0 : index
      %71 = vector.load %arg4[%c0_25, %c0_26, %c0_27] : memref<3x8x128xf32, #tpu.memory_space<vmem>>, vector<1x8x128xf32>
      %72 = vector.shape_cast %71 : vector<1x8x128xf32> to vector<8x128xf32>
      %73 = vector.shape_cast %62 : vector<8x128xf32> to vector<1x8x128xf32>
      tpu.vector_store %arg4[%c0_25, %c0_26, %c0_27], %73 {strides = array<i32>} : memref<3x8x128xf32, #tpu.memory_space<vmem>>, vector<1x8x128xf32>,
      %c1_28 = arith.constant 1 : index
      %c0_29 = arith.constant 0 : index
      %c0_30 = arith.constant 0 : index
      %74 = vector.load %arg4[%c1_28, %c0_29, %c0_30] : memref<3x8x128xf32, #tpu.memory_space<vmem>>, vector<1x8x128xf32>
      %75 = vector.shape_cast %74 : vector<1x8x128xf32> to vector<8x128xf32>
      %76 = vector.shape_cast %66 : vector<8x128xf32> to vector<1x8x128xf32>
      tpu.vector_store %arg4[%c1_28, %c0_29, %c0_30], %76 {strides = array<i32>} : memref<3x8x128xf32, #tpu.memory_space<vmem>>, vector<1x8x128xf32>,
      %c2_31 = arith.constant 2 : index
      %c0_32 = arith.constant 0 : index
      %c0_33 = arith.constant 0 : index
      %77 = vector.load %arg4[%c2_31, %c0_32, %c0_33] : memref<3x8x128xf32, #tpu.memory_space<vmem>>, vector<1x8x128xf32>
      %78 = vector.shape_cast %77 : vector<1x8x128xf32> to vector<8x128xf32>
      %79 = vector.shape_cast %70 : vector<8x128xf32> to vector<1x8x128xf32>
      tpu.vector_store %arg4[%c2_31, %c0_32, %c0_33], %79 {strides = array<i32>} : memref<3x8x128xf32, #tpu.memory_space<vmem>>, vector<1x8x128xf32>,
    } else {
    }
    return
  }
  func.func @transform_0(%arg0: i32, %arg1: i32) -> (i32, i32) {
    %c1_i32 = arith.constant 1 : i32
    %0 = arith.muli %arg0, %c1_i32 : i32
    %1 = arith.addi %0, %arg1 : i32
    %c0_i32 = arith.constant 0 : i32
    %2 = arith.minsi %1, %c0_i32 : i32
    %c0_i32_0 = arith.constant 0 : i32
    %c0_i32_1 = arith.constant 0 : i32
    return %2, %c0_i32_0 : i32, i32
  }
  func.func @transform_1(%arg0: i32, %arg1: i32) -> (i32, i32) {
    %c1_i32 = arith.constant 1 : i32
    %0 = arith.muli %arg0, %c1_i32 : i32
    %1 = arith.addi %0, %arg1 : i32
    %c0_i32 = arith.constant 0 : i32
    %2 = arith.minsi %1, %c0_i32 : i32
    %c0_i32_0 = arith.constant 0 : i32
    %c0_i32_1 = arith.constant 0 : i32
    return %2, %c0_i32_0 : i32, i32
  }
  func.func @transform_2(%arg0: i32, %arg1: i32) -> (i32, i32, i32) {
    %c0_i32 = arith.constant 0 : i32
    %c0_i32_0 = arith.constant 0 : i32
    %c0_i32_1 = arith.constant 0 : i32
    return %arg0, %c0_i32, %c0_i32_0 : i32, i32, i32
  }
}

</mosaic_0001>

<llo_original>
// kernel: tpu_custom_call.1
$region0: #{tpu_custom_call.1}
  #allocation0 [shape = 'u32[]', space=smem, size = 0x4, offset = 0x4, fixed_abs, tag = 'smem constant byte address 0x4 - core index']
  #allocation1 [shape = 'u32[72,128]{1,0:T(1,128)}', space=vmem, size = 0x9000, scoped, tag = 'internal scratch']
  %s0 = inlined_call_operand.hbm [shape: f32[16,128], index: 0, kind: input, shape index: {}]
  %s1 = inlined_call_operand.hbm [shape: f32[16,128], index: 1, kind: input, shape index: {}]
  %s2 = inlined_call_operand.hbm [shape: f32[3,8,128], index: 2, kind: output, shape index: {}]
  %s3 = sld [smem:[#allocation0]]
  $region38: #{tpu_custom_call.1} parent=0
    _
  %s5 = ssub.s32 1, %s3
  %s6 = scalar_select 0, %s5, %s3
  $region1: #{tpu_custom_call.1} parent=0
    #allocation2 [shape = 'u8[8192]{0}', space=vmem, size = 0x2000, scoped, tag = 'input window, operand 0, single buffered']
    #allocation3 [shape = 's32[1]{0}', space=sflag, size = 0x4, scoped, tag = 'scoped memory for tpu_custom_call.1']
    #allocation4 [shape = 's32[1]{0}', space=sflag, size = 0x4, scoped, tag = 'scoped memory for tpu_custom_call.1']
    #allocation5 [shape = 'u8[8192]{0}', space=vmem, size = 0x2000, scoped, tag = 'input window, operand 1, single buffered']
    #allocation6 [shape = 's32[1]{0}', space=sflag, size = 0x4, scoped, tag = 'scoped memory for tpu_custom_call.1']
    #allocation7 [shape = 'u8[12288]{0}', space=vmem, size = 0x3000, scoped, tag = 'output window, operand 0, single buffered']
    %7 = vsyncpa [#allocation3], 0
    %8 = vsyncpa [#allocation6], 0
    %9 = vsyncpa [#allocation4], 0
    // Predicated region
    $region2: #{tpu_custom_call.1} parent=1 // pred_check
      _
    $region3: #{tpu_custom_call.1} parent=1 // pred_check_branch
      %11 = sbr.rel (0) target = $region5
    $region4: #{tpu_custom_call.1} parent=1 // pred_region
      %s12 = sadd.s32 0, 0
      %p13 = scmp.lt.s32.totalorder %s12, 0
      %s14 = scalar_select %p13, %s12, 0
      %s15 = smul.u32 2, %s14
      %17 = vsyncadd [#allocation3], 0
      %s18 = smul.addr %s15, 8
      %s19 = scalar_lea.hbm %s0, %s18
      %s20 = sshll.u32 %s19, 4
      %s21 = int_to_ptr.hbm [resolvable:$true] %s20
      %s22 = sshll.u32 [#allocation2], 4
      %s23 = int_to_ptr.vmem [resolvable:$true] %s22
      %28 = dma.hbm_to_vmem [thread:$0]  %s21, 256, %s23, [#allocation3], 128, 128, 8
    $region5: #{tpu_custom_call.1} parent=1 // pred_fallthru
      _
    // Predicated region
    $region6: #{tpu_custom_call.1} parent=1 // pred_check
      _
    $region7: #{tpu_custom_call.1} parent=1 // pred_check_branch
      %30 = sbr.rel (0) target = $region9
    $region8: #{tpu_custom_call.1} parent=1 // pred_region
      %s31 = sadd.s32 0, 0
      %p32 = scmp.lt.s32.totalorder %s31, 0
      %s33 = scalar_select %p32, %s31, 0
      %s34 = smul.u32 2, %s33
      %36 = vsyncadd [#allocation6], 0
      %s37 = smul.addr %s34, 8
      %s38 = scalar_lea.hbm %s1, %s37
      %s39 = sshll.u32 %s38, 4
      %s40 = int_to_ptr.hbm [resolvable:$true] %s39
      %s41 = sshll.u32 [#allocation5], 4
      %s42 = int_to_ptr.vmem [resolvable:$true] %s41
      %47 = dma.hbm_to_vmem [thread:$0]  %s40, 256, %s42, [#allocation6], 128, 128, 8
    $region9: #{tpu_custom_call.1} parent=1 // pred_fallthru
      _
    // Predicated region
    $region10: #{tpu_custom_call.1} parent=1 // pred_check
      _
    $region11: #{tpu_custom_call.1} parent=1 // pred_check_branch
      %49 = sbr.rel (0) target = $region13
    $region12: #{tpu_custom_call.1} parent=1 // pred_region
      %51 = dma.done [#allocation3], 256
    $region13: #{tpu_custom_call.1} parent=1 // pred_fallthru
      _
    // Predicated region
    $region14: #{tpu_custom_call.1} parent=1 // pred_check
      _
    $region15: #{tpu_custom_call.1} parent=1 // pred_check_branch
      %53 = sbr.rel (0) target = $region17
    $region16: #{tpu_custom_call.1} parent=1 // pred_region
      %55 = dma.done [#allocation6], 256
    $region17: #{tpu_custom_call.1} parent=1 // pred_fallthru
      _
    %s56 = sadd.s32 0, 0
    %p57 = scmp.lt.s32.totalorder %s56, 0
    %s58 = scalar_select %p57, %s56, 0
    %s59 = smul.u32 2, %s58
    %s60 = sadd.s32 0, 0
    %p61 = scmp.lt.s32.totalorder %s60, 0
    %s62 = scalar_select %p61, %s60, 0
    %s63 = smul.u32 2, %s62
    %p64 = scmp.eq.s32.totalorder 0, 0
    // Predicated region
    $region18: #{tpu_custom_call.1} parent=1 // pred_check
      %p65 = pneg %p64
    $region19: #{tpu_custom_call.1} parent=1 // pred_check_branch
      %67 = sbr.rel (%p65) target = $region21
    $region20: #{tpu_custom_call.1} parent=1 // pred_region
      %68 = vst [vmem:[#allocation7] sm:$0xff] 0.0
      %69 = vst [vmem:[#allocation7 + $0x8] sm:$0xff] 0.0
      %70 = vst [vmem:[#allocation7 + $0x10] sm:$0xff] 0.0
    $region21: #{tpu_custom_call.1} parent=1 // pred_fallthru
      _
    %s71 = sadd.s32 0, 0
    %s72 = smul.u32 %s71, 16
    %s73 = sadd.s32 %s72, 16
    %p74 = scmp.le.s32.totalorder %s73, 16
    // Predicated region
    $region22: #{tpu_custom_call.1} parent=1 // pred_check
      %p75 = pneg %p74
    $region23: #{tpu_custom_call.1} parent=1 // pred_check_branch
      %77 = sbr.rel (%p75) target = $region25
    $region24: #{tpu_custom_call.1} parent=1 // pred_region
      %v78 = vld [vmem:[#allocation7] sm:$0xff]
      %s79 = scalar_lea.vmem [#allocation7], 8
      %v80 = vld [vmem:[%s79] sm:$0xff]
      %s81 = scalar_lea.vmem [#allocation7], 16
      %v82 = vld [vmem:[%s81] sm:$0xff]
      %v83 = vld [vmem:[#allocation2] sm:$0xff]
      %v84 = vld [vmem:[#allocation2 + $0x8] sm:$0xff]
      %v85 = vld [vmem:[#allocation5] sm:$0xff]
      %v86 = vld [vmem:[#allocation5 + $0x8] sm:$0xff]
      %v87 = vand.u32 2147483647, %v83
      %v88 = vand.u32 2147483647, %v84
      %v89 = vsub.f32 0.0, %v87
      %v90 = vsub.f32 0.0, %v88
      %v91 = vmul.f32 %v89, 1.442695
      %v92 = vpow.pop %v91
      %v93 = vmul.f32 %v90, 1.442695
      %v94 = vpow.pop %v93
      %v95 = vadd.f32 %v92, 1.0
      %v96 = vadd.f32 %v94, 1.0
      %v97 = vlog2.pop %v95
      %v98 = vmul.f32 %v97, 0.6931472
      %v99 = vlog2.pop %v96
      %v100 = vmul.f32 %v99, 0.6931472
      %v101 = vmax.f32 %v83, 0.0
      %v102 = vmax.f32 %v84, 0.0
      %v103 = vsub.f32 %v101, %v83
      %v104 = vsub.f32 %v102, %v84
      %v105 = vadd.f32 %v103, %v98
      %v106 = vadd.f32 %v104, %v100
      %v107 = vadd.f32 %v101, %v98
      %v108 = vadd.f32 %v102, %v100
      %v109 = vsub.f32 0.0, %v105
      %v110 = vsub.f32 0.0, %v106
      %v111 = vmul.f32 %v109, 1.442695
      %v112 = vpow.pop %v111
      %v113 = vmul.f32 %v110, 1.442695
      %v114 = vpow.pop %v113
      %v115 = vmin.f32 %v105, 20.723267
      %v116 = vmin.f32 %v106, 20.723267
      %v117 = vmin.f32 %v107, 20.723267
      %v118 = vmin.f32 %v108, 20.723267
      %v119 = vmul.f32 %v117, 0.25
      %v120 = vmul.f32 %v118, 0.25
      %v121 = vmul.f32 %v115, 0.5
      %v122 = vmul.f32 %v116, 0.5
      %v123 = vsub.f32 %v121, %v119
      %v124 = vsub.f32 %v122, %v120
      %v125 = vmul.f32 %v85, %v123
      %v126 = vmul.f32 %v86, %v124
      %v127 = vadd.f32 %v125, %v119
      %v128 = vadd.f32 %v126, %v120
      %v129 = vmul.f32 %v112, %v85
      %v130 = vmul.f32 %v114, %v86
      %v131 = vadd.f32 %v112, %v85
      %v132 = vadd.f32 %v114, %v86
      %v133 = vadd.f32 %v129, %v130
      %v134 = vadd.f32 %v78, %v133
      %v135 = vadd.f32 %v131, %v132
      %v136 = vadd.f32 %v80, %v135
      %v137 = vadd.f32 %v127, %v128
      %v138 = vadd.f32 %v82, %v137
      %139 = vst [vmem:[#allocation7] sm:$0xff] %v134
      %140 = vst [vmem:[%s79] sm:$0xff] %v136
      %141 = vst [vmem:[%s81] sm:$0xff] %v138
    $region25: #{tpu_custom_call.1} parent=1 // pred_fallthru
      _
    %p142 = scmp.gt.s32.totalorder %s73, 16
    // Predicated region
    $region26: #{tpu_custom_call.1} parent=1 // pred_check
      %p143 = pneg %p142
    $region27: #{tpu_custom_call.1} parent=1 // pred_check_branch
      %145 = sbr.rel (%p143) target = $region29
    $region28: #{tpu_custom_call.1} parent=1 // pred_region
      %v146 = vld [vmem:[#allocation7] sm:$0xff]
      %s147 = scalar_lea.vmem [#allocation7], 8
      %v148 = vld [vmem:[%s147] sm:$0xff]
      %s149 = scalar_lea.vmem [#allocation7], 16
      %v150 = vld [vmem:[%s149] sm:$0xff]
      %v151 = vld [vmem:[#allocation2] sm:$0xff]
      %v152 = vld [vmem:[#allocation2 + $0x8] sm:$0xff]
      %v153 = vld [vmem:[#allocation5] sm:$0xff]
      %v154 = vld [vmem:[#allocation5 + $0x8] sm:$0xff]
      %v155 = vand.u32 2147483647, %v151
      %v156 = vand.u32 2147483647, %v152
      %v157 = vsub.f32 0.0, %v155
      %v158 = vsub.f32 0.0, %v156
      %v159 = vmul.f32 %v157, 1.442695
      %v160 = vpow.pop %v159
      %v161 = vmul.f32 %v158, 1.442695
      %v162 = vpow.pop %v161
      %v163 = vadd.f32 %v160, 1.0
      %v164 = vadd.f32 %v162, 1.0
      %v165 = vlog2.pop %v163
      %v166 = vmul.f32 %v165, 0.6931472
      %v167 = vlog2.pop %v164
      %v168 = vmul.f32 %v167, 0.6931472
      %v169 = vmax.f32 %v151, 0.0
      %v170 = vmax.f32 %v152, 0.0
      %v171 = vsub.f32 %v169, %v151
      %v172 = vsub.f32 %v170, %v152
      %v173 = vadd.f32 %v171, %v166
      %v174 = vadd.f32 %v172, %v168
      %v175 = vadd.f32 %v169, %v166
      %v176 = vadd.f32 %v170, %v168
      %v177 = vsub.f32 0.0, %v173
      %v178 = vsub.f32 0.0, %v174
      %v179 = vmul.f32 %v177, 1.442695
      %v180 = vpow.pop %v179
      %v181 = vmul.f32 %v178, 1.442695
      %v182 = vpow.pop %v181
      %v183 = vmin.f32 %v173, 20.723267
      %v184 = vmin.f32 %v174, 20.723267
      %v185 = vmin.f32 %v175, 20.723267
      %v186 = vmin.f32 %v176, 20.723267
      %v187 = vmul.f32 %v185, 0.25
      %v188 = vmul.f32 %v186, 0.25
      %v189 = vmul.f32 %v183, 0.5
      %v190 = vmul.f32 %v184, 0.5
      %v191 = vsub.f32 %v189, %v187
      %v192 = vsub.f32 %v190, %v188
      %v193 = vmul.f32 %v153, %v191
      %v194 = vmul.f32 %v154, %v192
      %v195 = vadd.f32 %v193, %v187
      %v196 = vadd.f32 %v194, %v188
      %v197 = vmul.f32 %v180, %v153
      %v198 = vmul.f32 %v182, %v154
      %v199 = vadd.f32 %v180, %v153
      %v200 = vadd.f32 %v182, %v154
      %v201 = vlaneseq
      %v202 = vshrl.u32 %v201, 7
      %v203 = vadd.s32 %v202, 8
      %v204 = vstv %s72
      %v205 = vadd.s32 %v204, %v202
      %v206 = vadd.s32 %v204, %v203
      %vm207 = vcmp.lt.s32.totalorder %v205, 16
      %vm208 = vcmp.lt.s32.totalorder %v206, 16
      %v209 = vsel %vm207, %v197, 0.0
      %v210 = vsel %vm208, %v198, 0.0
      %v211 = vsel %vm207, %v199, 0.0
      %v212 = vsel %vm208, %v200, 0.0
      %v213 = vsel %vm207, %v195, 0.0
      %v214 = vsel %vm208, %v196, 0.0
      %v215 = vadd.f32 %v209, %v210
      %v216 = vadd.f32 %v146, %v215
      %v217 = vadd.f32 %v211, %v212
      %v218 = vadd.f32 %v148, %v217
      %v219 = vadd.f32 %v213, %v214
      %v220 = vadd.f32 %v150, %v219
      %221 = vst [vmem:[#allocation7] sm:$0xff] %v216
      %222 = vst [vmem:[%s147] sm:$0xff] %v218
      %223 = vst [vmem:[%s149] sm:$0xff] %v220
    $region29: #{tpu_custom_call.1} parent=1 // pred_fallthru
      _
    // Predicated region
    $region30: #{tpu_custom_call.1} parent=1 // pred_check
      _
    $region31: #{tpu_custom_call.1} parent=1 // pred_check_branch
      %225 = sbr.rel (0) target = $region33
    $region32: #{tpu_custom_call.1} parent=1 // pred_region
      %227 = vsyncadd [#allocation4], 0
      %s228 = sshll.u32 [#allocation7], 4
      %s229 = int_to_ptr.vmem [resolvable:$true] %s228
      %s230 = sshll.u32 %s2, 4
      %s231 = int_to_ptr.hbm [resolvable:$true] %s230
      %236 = dma.vmem_to_hbm [thread:$0]  %s229, 384, %s231, [#allocation4], 128, 128, 8
    $region33: #{tpu_custom_call.1} parent=1 // pred_fallthru
      _
    // Predicated region
    $region34: #{tpu_custom_call.1} parent=1 // pred_check
      _
    $region35: #{tpu_custom_call.1} parent=1 // pred_check_branch
      %238 = sbr.rel (0) target = $region37
    $region36: #{tpu_custom_call.1} parent=1 // pred_region
      %240 = dma.done [#allocation4], 384
    $region37: #{tpu_custom_call.1} parent=1 // pred_fallthru
      _
    %241 = vsyncpa [#allocation3], 1
    %242 = vsyncpa [#allocation6], 1
    %243 = vsyncpa [#allocation4], 1

</llo_original>
